<compile_context>
chip_gen: v7x
topology: tpu7x:2x2x1
jax: 0.10.0
libtpu: 0.0.40
codegen_flags: <defaults>
</compile_context>

<pallas_src>
import jax
import jax.numpy as jnp
from jax.experimental import pallas as pl
from jax.experimental.pallas import tpu as pltpu


_SQRT_2_OVER_PI = 0.7978845608028654  # sqrt(2/pi)


def _gelu_new(x):
    # GPT-2 "new" gelu: 0.5*x*(1 + tanh(sqrt(2/pi)*(x + 0.044715*x^3)))
    return 0.5 * x * (1.0 + jnp.tanh(_SQRT_2_OVER_PI * (x + 0.044715 * x * x * x)))


def _round_up(n, m):
    return ((n + m - 1) // m) * m


def _pick_divisor_tile(total, want, multiple):
    """Largest multiple of `multiple` that divides `total` and is <= want."""
    want = min(want, total)
    best = None
    cand = multiple
    while cand <= want:
        if total % cand == 0:
            best = cand
        cand += multiple
    return best if best is not None else total


def mlp_kernel(x_ref, w_in_ref, b_in_ref, w_out_ref, b_out_ref, o_ref, acc_ref):
    # x_ref:     (tm, d_model)   bf16
    # w_in_ref:  (d_model, tk)   bf16   (column block of W_in)
    # b_in_ref:  (1, tk)         f32
    # w_out_ref: (tk, d_model)   bf16   (row block of W_out)
    # b_out_ref: (1, d_model)    f32
    # o_ref:     (tm, d_model)   out dtype
    # acc_ref:   (tm, d_model)   f32 accumulator (resident across k)
    k = pl.program_id(1)

    @pl.when(k == 0)
    def _init():
        acc_ref[...] = jnp.zeros_like(acc_ref)

    pre = jnp.dot(x_ref[...], w_in_ref[...],
                  preferred_element_type=jnp.float32) + b_in_ref[...]
    post = _gelu_new(pre)
    acc_ref[...] += jnp.dot(post.astype(w_out_ref.dtype), w_out_ref[...],
                            preferred_element_type=jnp.float32)

    @pl.when(k == pl.num_programs(1) - 1)
    def _finalize():
        o_ref[...] = (acc_ref[...] + b_out_ref[...]).astype(o_ref.dtype)


def mlp_forward(x, w_in, b_in, w_out, b_out, *, tm=256, tk=512,
                compute_dtype=jnp.bfloat16):
    """x: [batch, posn, d_model] -> [batch, posn, d_model]"""
    batch, posn, d_model = x.shape
    d_mlp = w_in.shape[1]
    out_dtype = x.dtype
    T = batch * posn

    # Token tile: multiple of 16 (bf16 sublane packing), clamped to the
    # (rounded-up) token count so small test shapes don't over-pad.
    tm = max(16, min(_round_up(tm, 16), _round_up(T, 16)))
    # d_mlp tile: multiple of 128 lanes that divides d_mlp.
    tk = _pick_divisor_tile(d_mlp, tk, 128)

    Tp = _round_up(T, tm)
    x2d = x.reshape(T, d_model).astype(compute_dtype)
    if Tp != T:
        x2d = jnp.pad(x2d, ((0, Tp - T), (0, 0)))

    w_in_c = w_in.astype(compute_dtype)
    w_out_c = w_out.astype(compute_dtype)
    b_in2d = b_in.reshape(1, d_mlp).astype(jnp.float32)
    b_out2d = b_out.reshape(1, d_model).astype(jnp.float32)

    grid = (Tp // tm, d_mlp // tk)

    cbytes = jnp.dtype(compute_dtype).itemsize
    obytes = jnp.dtype(out_dtype).itemsize
    cost = pl.CostEstimate(
        flops=4 * Tp * d_model * d_mlp,            # two matmuls
        transcendentals=Tp * d_mlp,                # one tanh per mlp activation
        bytes_accessed=(Tp * d_model * cbytes      # x
                        + 2 * d_model * d_mlp * cbytes  # W_in + W_out
                        + (d_mlp + d_model) * 4         # biases
                        + Tp * d_model * obytes),       # out
    )

    out2d = pl.pallas_call(
        mlp_kernel,
        out_shape=jax.ShapeDtypeStruct((Tp, d_model), out_dtype),
        grid_spec=pltpu.PrefetchScalarGridSpec(
            num_scalar_prefetch=0,
            grid=grid,
            in_specs=[
                pl.BlockSpec((tm, d_model), lambda i, k: (i, 0)),   # x tile
                pl.BlockSpec((d_model, tk), lambda i, k: (0, k)),   # W_in cols
                pl.BlockSpec((1, tk), lambda i, k: (0, k)),         # b_in slice
                pl.BlockSpec((tk, d_model), lambda i, k: (k, 0)),   # W_out rows
                pl.BlockSpec((1, d_model), lambda i, k: (0, 0)),    # b_out
            ],
            out_specs=pl.BlockSpec((tm, d_model), lambda i, k: (i, 0)),
            scratch_shapes=[pltpu.VMEM((tm, d_model), jnp.float32)],
        ),
        compiler_params=pltpu.CompilerParams(
            dimension_semantics=("parallel", "arbitrary"),
            vmem_limit_bytes=32 * 1024 * 1024,
        ),
        cost_estimate=cost,
    )(x2d, w_in_c, b_in2d, w_out_c, b_out2d)

    return out2d[:T].reshape(batch, posn, d_model)


if __name__ == "__main__":
    # Small config consistent with the module (scaled down from 768/3072).
    batch, posn = 2, 8
    d_model, d_mlp = 128, 512
    init_range = 0.02

    key = jax.random.PRNGKey(0)
    kx, kwin, kwout = jax.random.split(key, 3)

    x = jax.random.normal(kx, (batch, posn, d_model), dtype=jnp.float32)
    W_in = init_range * jax.random.normal(kwin, (d_model, d_mlp), dtype=jnp.float32)
    W_out = init_range * jax.random.normal(kwout, (d_mlp, d_model), dtype=jnp.float32)
    b_in = jnp.zeros((d_mlp,), dtype=jnp.float32)
    b_out = jnp.zeros((d_model,), dtype=jnp.float32)

    out = mlp_forward(x, W_in, b_in, W_out, b_out)
    out = jax.block_until_ready(out)
    assert out.shape == (batch, posn, d_model)

    # Reference 1: mimic the kernel's bf16-operand / f32-accumulate math (tight).
    xb = x.reshape(batch * posn, d_model).astype(jnp.bfloat16)
    pre_b = jnp.dot(xb, W_in.astype(jnp.bfloat16),
                    preferred_element_type=jnp.float32) + b_in
    post_b = _gelu_new(pre_b)
    out_b = jnp.dot(post_b.astype(jnp.bfloat16), W_out.astype(jnp.bfloat16),
                    preferred_element_type=jnp.float32) + b_out
    out_b = out_b.reshape(batch, posn, d_model)
    assert jnp.allclose(out, out_b, atol=1e-3, rtol=1e-3), \
        f"max abs diff (bf16 ref) = {jnp.max(jnp.abs(out - out_b))}"

    # Reference 2: pure f32 semantics of the original PyTorch module (loose).
    pre_ref = jnp.einsum("bpd,dm->bpm", x, W_in) + b_in
    post_ref = _gelu_new(pre_ref)
    out_ref = jnp.einsum("bpm,md->bpd", post_ref, W_out) + b_out
    assert jnp.allclose(out, out_ref, atol=2e-2, rtol=2e-2), \
        f"max abs diff (f32 ref) = {jnp.max(jnp.abs(out - out_ref))}"

    print("KERNEL_OK")
</pallas_src>

<mosaic_0001>
module attributes {stable_mosaic.version = 11 : i64} {
  func.func @mlp_kernel(%arg0: i32, %arg1: i32, %arg2: memref<16x128xbf16, #tpu.memory_space<vmem>>, %arg3: memref<128x512xbf16, #tpu.memory_space<vmem>>, %arg4: memref<1x512xf32, #tpu.memory_space<vmem>>, %arg5: memref<512x128xbf16, #tpu.memory_space<vmem>>, %arg6: memref<1x128xf32, #tpu.memory_space<vmem>>, %arg7: memref<16x128xf32, #tpu.memory_space<vmem>>, %arg8: memref<16x128xf32, #tpu.memory_space<vmem>>) attributes {dimension_semantics = [#tpu.dimension_semantics<parallel>, #tpu.dimension_semantics<arbitrary>], iteration_bounds = array<i64: 1, 1>, scalar_prefetch = 0 : i64, scratch_operands = 1 : i64, tpu.core_type = #tpu.core_type<tc>, window_params = [{transform_indices = @transform_0, window_bounds = array<i64: 16, 128>}, {transform_indices = @transform_1, window_bounds = array<i64: 128, 512>}, {transform_indices = @transform_2, window_bounds = array<i64: 1, 512>}, {transform_indices = @transform_3, window_bounds = array<i64: 512, 128>}, {pipeline_mode = #tpu.pipeline_mode<synchronous>, transform_indices = @transform_4, window_bounds = array<i64: 1, 128>}, {transform_indices = @transform_5, window_bounds = array<i64: 16, 128>}]} {
    %c0_i32 = arith.constant 0 : i32
    %0 = arith.cmpi eq, %arg1, %c0_i32 : i32
    %1 = arith.extui %0 : i1 to i32
    %c0_i32_0 = arith.constant 0 : i32
    %2 = arith.cmpi ne, %1, %c0_i32_0 : i32
    scf.if %2 {
      %cst_19 = arith.constant 0.000000e+00 : f32
      %31 = vector.broadcast %cst_19 : f32 to vector<16x128xf32>
      %c0_20 = arith.constant 0 : index
      %c0_21 = arith.constant 0 : index
      %32 = vector.load %arg8[%c0_20, %c0_21] : memref<16x128xf32, #tpu.memory_space<vmem>>, vector<16x128xf32>
      tpu.vector_store %arg8[%c0_20, %c0_21], %31 {strides = array<i32>} : memref<16x128xf32, #tpu.memory_space<vmem>>, vector<16x128xf32>,
    } else {
    }
    %c0 = arith.constant 0 : index
    %c0_1 = arith.constant 0 : index
    %3 = vector.load %arg2[%c0, %c0_1] : memref<16x128xbf16, #tpu.memory_space<vmem>>, vector<16x128xbf16>
    %c0_2 = arith.constant 0 : index
    %c0_3 = arith.constant 0 : index
    %4 = vector.load %arg3[%c0_2, %c0_3] : memref<128x512xbf16, #tpu.memory_space<vmem>>, vector<128x512xbf16>
    %cst = arith.constant dense<0.000000e+00> : vector<16x512xf32>
    %5 = tpu.matmul %3, %4, %cst {dimension_numbers = #tpu.dot_dimension_numbers<[1], [0], [0], [1], [0, 0, 1, 1], [], []>} : vector<16x128xbf16>, vector<128x512xbf16>, vector<16x512xf32> -> vector<16x512xf32>
    %c0_4 = arith.constant 0 : index
    %c0_5 = arith.constant 0 : index
    %6 = vector.load %arg4[%c0_4, %c0_5] : memref<1x512xf32, #tpu.memory_space<vmem>>, vector<1x512xf32>
    %7 = vector.broadcast %6 : vector<1x512xf32> to vector<16x512xf32>
    %8 = arith.addf %5, %7 : vector<16x512xf32>
    %cst_6 = arith.constant 5.000000e-01 : f32
    %9 = vector.broadcast %cst_6 : f32 to vector<16x512xf32>
    %10 = arith.mulf %9, %8 : vector<16x512xf32>
    %cst_7 = arith.constant 4.471500e-02 : f32
    %11 = vector.broadcast %cst_7 : f32 to vector<16x512xf32>
    %12 = arith.mulf %11, %8 : vector<16x512xf32>
    %13 = arith.mulf %12, %8 : vector<16x512xf32>
    %14 = arith.mulf %13, %8 : vector<16x512xf32>
    %15 = arith.addf %8, %14 : vector<16x512xf32>
    %cst_8 = arith.constant 0.797884583 : f32
    %16 = vector.broadcast %cst_8 : f32 to vector<16x512xf32>
    %17 = arith.mulf %16, %15 : vector<16x512xf32>
    %18 = math.tanh %17 : vector<16x512xf32>
    %cst_9 = arith.constant 1.000000e+00 : f32
    %19 = vector.broadcast %cst_9 : f32 to vector<16x512xf32>
    %20 = arith.addf %19, %18 : vector<16x512xf32>
    %21 = arith.mulf %10, %20 : vector<16x512xf32>
    %c0_10 = arith.constant 0 : index
    %c0_11 = arith.constant 0 : index
    %22 = vector.load %arg8[%c0_10, %c0_11] : memref<16x128xf32, #tpu.memory_space<vmem>>, vector<16x128xf32>
    %23 = arith.truncf %21 : vector<16x512xf32> to vector<16x512xbf16>
    %c0_12 = arith.constant 0 : index
    %c0_13 = arith.constant 0 : index
    %24 = vector.load %arg5[%c0_12, %c0_13] : memref<512x128xbf16, #tpu.memory_space<vmem>>, vector<512x128xbf16>
    %cst_14 = arith.constant dense<0.000000e+00> : vector<16x128xf32>
    %25 = tpu.matmul %23, %24, %cst_14 {dimension_numbers = #tpu.dot_dimension_numbers<[1], [0], [0], [1], [0, 0, 1, 1], [], []>} : vector<16x512xbf16>, vector<512x128xbf16>, vector<16x128xf32> -> vector<16x128xf32>
    %26 = arith.addf %22, %25 : vector<16x128xf32>
    %c0_15 = arith.constant 0 : index
    %c0_16 = arith.constant 0 : index
    %27 = vector.load %arg8[%c0_15, %c0_16] : memref<16x128xf32, #tpu.memory_space<vmem>>, vector<16x128xf32>
    tpu.vector_store %arg8[%c0_15, %c0_16], %26 {strides = array<i32>} : memref<16x128xf32, #tpu.memory_space<vmem>>, vector<16x128xf32>,
    %c0_i32_17 = arith.constant 0 : i32
    %28 = arith.cmpi eq, %arg1, %c0_i32_17 : i32
    %29 = arith.extui %28 : i1 to i32
    %c0_i32_18 = arith.constant 0 : i32
    %30 = arith.cmpi ne, %29, %c0_i32_18 : i32
    scf.if %30 {
      %c0_19 = arith.constant 0 : index
      %c0_20 = arith.constant 0 : index
      %31 = vector.load %arg8[%c0_19, %c0_20] : memref<16x128xf32, #tpu.memory_space<vmem>>, vector<16x128xf32>
      %c0_21 = arith.constant 0 : index
      %c0_22 = arith.constant 0 : index
      %32 = vector.load %arg6[%c0_21, %c0_22] : memref<1x128xf32, #tpu.memory_space<vmem>>, vector<1x128xf32>
      %33 = vector.broadcast %32 : vector<1x128xf32> to vector<16x128xf32>
      %34 = arith.addf %31, %33 : vector<16x128xf32>
      %c0_23 = arith.constant 0 : index
      %c0_24 = arith.constant 0 : index
      %35 = vector.load %arg7[%c0_23, %c0_24] : memref<16x128xf32, #tpu.memory_space<vmem>>, vector<16x128xf32>
      tpu.vector_store %arg7[%c0_23, %c0_24], %34 {strides = array<i32>} : memref<16x128xf32, #tpu.memory_space<vmem>>, vector<16x128xf32>,
    } else {
    }
    return
  }
  func.func @transform_0(%arg0: i32, %arg1: i32) -> (i32, i32) {
    %c0_i32 = arith.constant 0 : i32
    %c0_i32_0 = arith.constant 0 : i32
    return %arg0, %c0_i32 : i32, i32
  }
  func.func @transform_1(%arg0: i32, %arg1: i32) -> (i32, i32) {
    %c0_i32 = arith.constant 0 : i32
    %c0_i32_0 = arith.constant 0 : i32
    return %c0_i32, %arg1 : i32, i32
  }
  func.func @transform_2(%arg0: i32, %arg1: i32) -> (i32, i32) {
    %c0_i32 = arith.constant 0 : i32
    %c0_i32_0 = arith.constant 0 : i32
    return %c0_i32, %arg1 : i32, i32
  }
  func.func @transform_3(%arg0: i32, %arg1: i32) -> (i32, i32) {
    %c0_i32 = arith.constant 0 : i32
    %c0_i32_0 = arith.constant 0 : i32
    return %arg1, %c0_i32 : i32, i32
  }
  func.func @transform_4(%arg0: i32, %arg1: i32) -> (i32, i32) {
    %c0_i32 = arith.constant 0 : i32
    %c0_i32_0 = arith.constant 0 : i32
    %c0_i32_1 = arith.constant 0 : i32
    return %c0_i32, %c0_i32_0 : i32, i32
  }
  func.func @transform_5(%arg0: i32, %arg1: i32) -> (i32, i32) {
    %c0_i32 = arith.constant 0 : i32
    %c0_i32_0 = arith.constant 0 : i32
    return %arg0, %c0_i32 : i32, i32
  }
}

</mosaic_0001>

<llo_original>
// kernel: tpu_custom_call.1
$region0: #{tpu_custom_call.1}
  #allocation0 [shape = 'u32[]', space=smem, size = 0x4, offset = 0x4, fixed_abs, tag = 'smem constant byte address 0x4 - core index']
  #allocation1 [shape = 'u32[144,128]{1,0:T(1,128)}', space=vmem, size = 0x12000, scoped, tag = 'internal scratch']
  #allocation2 [shape = 'f32[16,128]{1,0:T(8,128)}', space=vmem, size = 0x2000, scoped, tag = 'scratch operand']
  %s0 = inlined_call_operand.hbm [shape: bf16[16,128], index: 0, kind: input, shape index: {}]
  %s1 = inlined_call_operand.hbm [shape: bf16[128,512], index: 1, kind: input, shape index: {}]
  %s2 = inlined_call_operand.vmem [shape: f32[1,512], index: 2, kind: input, shape index: {}]
  %s3 = inlined_call_operand.hbm [shape: bf16[512,128], index: 3, kind: input, shape index: {}]
  %s4 = inlined_call_operand.vmem [shape: f32[1,128], index: 4, kind: input, shape index: {}]
  %s5 = inlined_call_operand.hbm [shape: f32[16,128], index: 5, kind: output, shape index: {}]
  %s6 = sld [smem:[#allocation0]]
  $region50: #{tpu_custom_call.1} parent=0
    _
  %s8 = ssub.s32 1, %s6
  %s9 = scalar_select 0, %s8, %s6
  $region1: #{tpu_custom_call.1} parent=0
    #allocation3 [shape = 'u8[4096]{0}', space=vmem, size = 0x1000, scoped, tag = 'input window, operand 0, single buffered']
    #allocation4 [shape = 's32[1]{0}', space=sflag, size = 0x4, scoped, tag = 'scoped memory for tpu_custom_call.1']
    #allocation5 [shape = 's32[1]{0}', space=sflag, size = 0x4, scoped, tag = 'scoped memory for tpu_custom_call.1']
    #allocation6 [shape = 'u8[131072]{0}', space=vmem, size = 0x20000, scoped, tag = 'input window, operand 1, single buffered']
    #allocation7 [shape = 's32[1]{0}', space=sflag, size = 0x4, scoped, tag = 'scoped memory for tpu_custom_call.1']
    #allocation8 [shape = 'u8[131072]{0}', space=vmem, size = 0x20000, scoped, tag = 'input window, operand 3, single buffered']
    #allocation9 [shape = 'u8[8192]{0}', space=vmem, size = 0x2000, scoped, tag = 'output window, operand 0, single buffered']
    %10 = vsyncpa [#allocation4], 0
    %11 = vsyncpa [#allocation7], 0
    %12 = vsyncpa [#allocation5], 0
    // Predicated region
    $region2: #{tpu_custom_call.1} parent=1 // pred_check
      _
    $region3: #{tpu_custom_call.1} parent=1 // pred_check_branch
      %14 = sbr.rel (0) target = $region5
    $region4: #{tpu_custom_call.1} parent=1 // pred_region
      %s16 = ssub.s32 128, 128
      %17 = vsyncadd [#allocation4], %s16
      %s18 = sshll.u32 [#allocation3], 4
      %s19 = int_to_ptr.vmem [resolvable:$true] %s18
      %24 = dma.hbm_to_vmem [thread:$0]  %s0, 128, %s19, [#allocation4], 64, 64, 4
    $region5: #{tpu_custom_call.1} parent=1 // pred_fallthru
      _
    // Predicated region
    $region6: #{tpu_custom_call.1} parent=1 // pred_check
      _
    $region7: #{tpu_custom_call.1} parent=1 // pred_check_branch
      %26 = sbr.rel (0) target = $region9
    $region8: #{tpu_custom_call.1} parent=1 // pred_region
      %s28 = ssub.s32 4096, 4096
      %29 = vsyncadd [#allocation7], %s28
      %s30 = sshll.u32 [#allocation6], 4
      %s31 = int_to_ptr.vmem [resolvable:$true] %s30
      %36 = dma.hbm_to_vmem [thread:$0]  %s1, 4096, %s31, [#allocation7], 256, 256, 16
    $region9: #{tpu_custom_call.1} parent=1 // pred_fallthru
      _
    // Predicated region
    $region10: #{tpu_custom_call.1} parent=1 // pred_check
      _
    $region11: #{tpu_custom_call.1} parent=1 // pred_check_branch
      %38 = sbr.rel (0) target = $region13
    $region12: #{tpu_custom_call.1} parent=1 // pred_region
      _
    $region13: #{tpu_custom_call.1} parent=1 // pred_fallthru
      _
    // Predicated region
    $region14: #{tpu_custom_call.1} parent=1 // pred_check
      _
    $region15: #{tpu_custom_call.1} parent=1 // pred_check_branch
      %40 = sbr.rel (0) target = $region17
    $region16: #{tpu_custom_call.1} parent=1 // pred_region
      %s42 = ssub.s32 4096, 4096
      %43 = vsyncadd [#allocation7], %s42
      %s44 = sshll.u32 [#allocation8], 4
      %s45 = int_to_ptr.vmem [resolvable:$true] %s44
      %50 = dma.hbm_to_vmem [thread:$0]  %s3, 4096, %s45, [#allocation7], 64, 64, 4
    $region17: #{tpu_custom_call.1} parent=1 // pred_fallthru
      _
    // Predicated region
    $region18: #{tpu_custom_call.1} parent=1 // pred_check
      _
    $region19: #{tpu_custom_call.1} parent=1 // pred_check_branch
      %52 = sbr.rel (0) target = $region21
    $region20: #{tpu_custom_call.1} parent=1 // pred_region
      _
    $region21: #{tpu_custom_call.1} parent=1 // pred_fallthru
      _
    // Predicated region
    $region22: #{tpu_custom_call.1} parent=1 // pred_check
      _
    $region23: #{tpu_custom_call.1} parent=1 // pred_check_branch
      %54 = sbr.rel (0) target = $region25
    $region24: #{tpu_custom_call.1} parent=1 // pred_region
      %55 = dma.done [#allocation4], 128
    $region25: #{tpu_custom_call.1} parent=1 // pred_fallthru
      _
    // Predicated region
    $region26: #{tpu_custom_call.1} parent=1 // pred_check
      _
    $region27: #{tpu_custom_call.1} parent=1 // pred_check_branch
      %57 = sbr.rel (0) target = $region29
    $region28: #{tpu_custom_call.1} parent=1 // pred_region
      %58 = dma.done [#allocation7], 4096
    $region29: #{tpu_custom_call.1} parent=1 // pred_fallthru
      _
    // Predicated region
    $region30: #{tpu_custom_call.1} parent=1 // pred_check
      _
    $region31: #{tpu_custom_call.1} parent=1 // pred_check_branch
      %60 = sbr.rel (0) target = $region33
    $region32: #{tpu_custom_call.1} parent=1 // pred_region
      %61 = dma.done [#allocation7], 4096
    $region33: #{tpu_custom_call.1} parent=1 // pred_fallthru
      _
    %p63 = scmp.eq.s32.totalorder 0, 0
    // Predicated region
    $region34: #{tpu_custom_call.1} parent=1 // pred_check
      %p64 = pneg %p63
    $region35: #{tpu_custom_call.1} parent=1 // pred_check_branch
      %66 = sbr.rel (%p64) target = $region37
    $region36: #{tpu_custom_call.1} parent=1 // pred_region
      %67 = vst [vmem:[#allocation2] sm:$0xff] 0.0
      %68 = vst [vmem:[#allocation2 + $0x8] sm:$0xff] 0.0
    $region37: #{tpu_custom_call.1} parent=1 // pred_fallthru
      _
    %v69 = vld [vmem:[#allocation3] sm:$0xf]
    %v70 = vld [vmem:[#allocation3 + $0x4] sm:$0xf]
    %v71 = vld [vmem:[#allocation6] sm:$0xff]
    %v72 = vld [vmem:[#allocation6 + $0x8] sm:$0xff]
    %v73 = vld [vmem:[#allocation6 + $0x10] sm:$0xff]
    %v74 = vld [vmem:[#allocation6 + $0x18] sm:$0xff]
    %v75 = vld [vmem:[#allocation6 + $0x20] sm:$0xff]
    %v76 = vld [vmem:[#allocation6 + $0x28] sm:$0xff]
    %v77 = vld [vmem:[#allocation6 + $0x30] sm:$0xff]
    %v78 = vld [vmem:[#allocation6 + $0x38] sm:$0xff]
    %v79 = vld [vmem:[#allocation6 + $0x40] sm:$0xff]
    %v80 = vld [vmem:[#allocation6 + $0x48] sm:$0xff]
    %v81 = vld [vmem:[#allocation6 + $0x50] sm:$0xff]
    %v82 = vld [vmem:[#allocation6 + $0x58] sm:$0xff]
    %v83 = vld [vmem:[#allocation6 + $0x60] sm:$0xff]
    %v84 = vld [vmem:[#allocation6 + $0x68] sm:$0xff]
    %v85 = vld [vmem:[#allocation6 + $0x70] sm:$0xff]
    %v86 = vld [vmem:[#allocation6 + $0x78] sm:$0xff]
    %v87 = vld [vmem:[#allocation6 + $0x80] sm:$0xff]
    %v88 = vld [vmem:[#allocation6 + $0x88] sm:$0xff]
    %v89 = vld [vmem:[#allocation6 + $0x90] sm:$0xff]
    %v90 = vld [vmem:[#allocation6 + $0x98] sm:$0xff]
    %v91 = vld [vmem:[#allocation6 + $0xa0] sm:$0xff]
    %v92 = vld [vmem:[#allocation6 + $0xa8] sm:$0xff]
    %v93 = vld [vmem:[#allocation6 + $0xb0] sm:$0xff]
    %v94 = vld [vmem:[#allocation6 + $0xb8] sm:$0xff]
    %v95 = vld [vmem:[#allocation6 + $0xc0] sm:$0xff]
    %v96 = vld [vmem:[#allocation6 + $0xc8] sm:$0xff]
    %v97 = vld [vmem:[#allocation6 + $0xd0] sm:$0xff]
    %v98 = vld [vmem:[#allocation6 + $0xd8] sm:$0xff]
    %v99 = vld [vmem:[#allocation6 + $0xe0] sm:$0xff]
    %v100 = vld [vmem:[#allocation6 + $0xe8] sm:$0xff]
    %v101 = vld [vmem:[#allocation6 + $0xf0] sm:$0xff]
    %v102 = vld [vmem:[#allocation6 + $0xf8] sm:$0xff]
    %v103 = vld [vmem:[%s2] sm:$0xf]
    %v105 = vlaneseq
    %v106 = vshrl.u32 %v105, 7
    %v107 = vsub.s32 0, %v106
    %v108 = vrot.slane %v103, %v107
    %v109 = vlaneseq
    %v110 = vshrl.u32 %v109, 7
    %v111 = vsub.s32 1, %v110
    %v112 = vrot.slane %v103, %v111
    %v113 = vlaneseq
    %v114 = vshrl.u32 %v113, 7
    %v115 = vsub.s32 2, %v114
    %v116 = vrot.slane %v103, %v115
    %v117 = vlaneseq
    %v118 = vshrl.u32 %v117, 7
    %v119 = vsub.s32 3, %v118
    %v120 = vrot.slane %v103, %v119
    %v127 = vunpack.c.l.b16 %v69
    %v128 = vunpack.c.l.b16 %v70
    %v129 = vpack.c.b16 %v128, %v127
    %v163 = vunpack.c.l.b16 %v71
    %v164 = vunpack.c.h.b16 %v71
    %v165 = vunpack.c.l.b16 %v72
    %v166 = vunpack.c.h.b16 %v72
    %v167 = vunpack.c.l.b16 %v73
    %v168 = vunpack.c.h.b16 %v73
    %v169 = vunpack.c.l.b16 %v74
    %v170 = vunpack.c.h.b16 %v74
    %v171 = vunpack.c.l.b16 %v75
    %v172 = vunpack.c.h.b16 %v75
    %v173 = vunpack.c.l.b16 %v76
    %v174 = vunpack.c.h.b16 %v76
    %v175 = vunpack.c.l.b16 %v77
    %v176 = vunpack.c.h.b16 %v77
    %v177 = vunpack.c.l.b16 %v78
    %v178 = vunpack.c.h.b16 %v78
    %v179 = vunpack.c.l.b16 %v79
    %v180 = vunpack.c.h.b16 %v79
    %v181 = vunpack.c.l.b16 %v80
    %v182 = vunpack.c.h.b16 %v80
    %v183 = vunpack.c.l.b16 %v81
    %v184 = vunpack.c.h.b16 %v81
    %v185 = vunpack.c.l.b16 %v82
    %v186 = vunpack.c.h.b16 %v82
    %v187 = vunpack.c.l.b16 %v83
    %v188 = vunpack.c.h.b16 %v83
    %v189 = vunpack.c.l.b16 %v84
    %v190 = vunpack.c.h.b16 %v84
    %v191 = vunpack.c.l.b16 %v85
    %v192 = vunpack.c.h.b16 %v85
    %v193 = vunpack.c.l.b16 %v86
    %v194 = vunpack.c.h.b16 %v86
    %v195 = vunpack.c.l.b16 %v87
    %v196 = vunpack.c.h.b16 %v87
    %v197 = vunpack.c.l.b16 %v88
    %v198 = vunpack.c.h.b16 %v88
    %v199 = vunpack.c.l.b16 %v89
    %v200 = vunpack.c.h.b16 %v89
    %v201 = vunpack.c.l.b16 %v90
    %v202 = vunpack.c.h.b16 %v90
    %v203 = vunpack.c.l.b16 %v91
    %v204 = vunpack.c.h.b16 %v91
    %v205 = vunpack.c.l.b16 %v92
    %v206 = vunpack.c.h.b16 %v92
    %v207 = vunpack.c.l.b16 %v93
    %v208 = vunpack.c.h.b16 %v93
    %v209 = vunpack.c.l.b16 %v94
    %v210 = vunpack.c.h.b16 %v94
    %v211 = vunpack.c.l.b16 %v95
    %v212 = vunpack.c.h.b16 %v95
    %v213 = vunpack.c.l.b16 %v96
    %v214 = vunpack.c.h.b16 %v96
    %v215 = vunpack.c.l.b16 %v97
    %v216 = vunpack.c.h.b16 %v97
    %v217 = vunpack.c.l.b16 %v98
    %v218 = vunpack.c.h.b16 %v98
    %v219 = vunpack.c.l.b16 %v99
    %v220 = vunpack.c.h.b16 %v99
    %v221 = vunpack.c.l.b16 %v100
    %v222 = vunpack.c.h.b16 %v100
    %v223 = vunpack.c.l.b16 %v101
    %v224 = vunpack.c.h.b16 %v101
    %v225 = vunpack.c.l.b16 %v102
    %v226 = vunpack.c.h.b16 %v102
    %v227 = vpack.c.b16 %v167, %v163
    %v228 = vpack.c.b16 %v168, %v164
    %v229 = vpack.c.b16 %v169, %v165
    %v230 = vpack.c.b16 %v170, %v166
    %v231 = vpack.c.b16 %v175, %v171
    %v232 = vpack.c.b16 %v176, %v172
    %v233 = vpack.c.b16 %v177, %v173
    %v234 = vpack.c.b16 %v178, %v174
    %v235 = vpack.c.b16 %v183, %v179
    %v236 = vpack.c.b16 %v184, %v180
    %v237 = vpack.c.b16 %v185, %v181
    %v238 = vpack.c.b16 %v186, %v182
    %v239 = vpack.c.b16 %v191, %v187
    %v240 = vpack.c.b16 %v192, %v188
    %v241 = vpack.c.b16 %v193, %v189
    %v242 = vpack.c.b16 %v194, %v190
    %v243 = vpack.c.b16 %v199, %v195
    %v244 = vpack.c.b16 %v200, %v196
    %v245 = vpack.c.b16 %v201, %v197
    %v246 = vpack.c.b16 %v202, %v198
    %v247 = vpack.c.b16 %v207, %v203
    %v248 = vpack.c.b16 %v208, %v204
    %v249 = vpack.c.b16 %v209, %v205
    %v250 = vpack.c.b16 %v210, %v206
    %v251 = vpack.c.b16 %v215, %v211
    %v252 = vpack.c.b16 %v216, %v212
    %v253 = vpack.c.b16 %v217, %v213
    %v254 = vpack.c.b16 %v218, %v214
    %v255 = vpack.c.b16 %v223, %v219
    %v256 = vpack.c.b16 %v224, %v220
    %v257 = vpack.c.b16 %v225, %v221
    %v258 = vpack.c.b16 %v226, %v222
    %291 = vmatprep.subr.bf16.mxu0 %v228
    %292 = vmatpush1.bf16.msra.mxu0 %v227
    %293 = vmatprep.subr.bf16.mxu0 %v232
    %294 = vmatpush1.bf16.msra.mxu0 %v231
    %295 = vmatprep.subr.bf16.mxu0 %v236
    %296 = vmatpush1.bf16.msra.mxu0 %v235
    %297 = vmatprep.subr.bf16.mxu0 %v240
    %298 = vmatpush1.bf16.msra.mxu0 %v239
    %299 = vmatprep.subr.bf16.mxu0 %v244
    %300 = vmatpush1.bf16.msra.mxu0 %v243
    %301 = vmatprep.subr.bf16.mxu0 %v248
    %302 = vmatpush1.bf16.msra.mxu0 %v247
    %303 = vmatprep.subr.bf16.mxu0 %v252
    %304 = vmatpush1.bf16.msra.mxu0 %v251
    %305 = vmatprep.subr.bf16.mxu0 %v256
    %306 = vmatpush1.bf16.msra.mxu0 %v255
    %307 = vmatprep.subr.bf16.mxu0 0
    %308 = vmatpush1.bf16.msra.mxu0 0
    %309 = vmatprep.subr.bf16.mxu0 0
    %310 = vmatpush1.bf16.msra.mxu0 0
    %311 = vmatprep.subr.bf16.mxu0 0
    %312 = vmatpush1.bf16.msra.mxu0 0
    %313 = vmatprep.subr.bf16.mxu0 0
    %314 = vmatpush1.bf16.msra.mxu0 0
    %315 = vmatprep.subr.bf16.mxu0 0
    %316 = vmatpush1.bf16.msra.mxu0 0
    %317 = vmatprep.subr.bf16.mxu0 0
    %318 = vmatpush1.bf16.msra.mxu0 0
    %319 = vmatprep.subr.bf16.mxu0 0
    %320 = vmatpush1.bf16.msra.mxu0 0
    %321 = vmatprep.subr.bf16.mxu0 0
    %322 = vmatpush1.bf16.msra.mxu0 0
    %323 = vmatprep.mubr.bf16.mxu0 0
    %324 = vmatmul.mubr.bf16.gmra.mrb[0].mxu0 %v129
    %v325 = vpop.f32.mrb[0].mxu0
    %v326 = vadd.f32 %v108, %v325
    %v327 = vpop.f32.mrb[0].mxu0
    %v328 = vadd.f32 %v112, %v327
    %v329 = vpop.f32.mrb[0].mxu0
    %v330 = vadd.f32 %v108, %v329
    %v331 = vpop.f32.mrb[0].mxu0
    %v332 = vadd.f32 %v112, %v331
    %333 = vdwg.mxu0
    %334 = vmatprep.subr.bf16.mxu0 %v230
    %335 = vmatpush1.bf16.msra.mxu0 %v229
    %336 = vmatprep.subr.bf16.mxu0 %v234
    %337 = vmatpush1.bf16.msra.mxu0 %v233
    %338 = vmatprep.subr.bf16.mxu0 %v238
    %339 = vmatpush1.bf16.msra.mxu0 %v237
    %340 = vmatprep.subr.bf16.mxu0 %v242
    %341 = vmatpush1.bf16.msra.mxu0 %v241
    %342 = vmatprep.subr.bf16.mxu0 %v246
    %343 = vmatpush1.bf16.msra.mxu0 %v245
    %344 = vmatprep.subr.bf16.mxu0 %v250
    %345 = vmatpush1.bf16.msra.mxu0 %v249
    %346 = vmatprep.subr.bf16.mxu0 %v254
    %347 = vmatpush1.bf16.msra.mxu0 %v253
    %348 = vmatprep.subr.bf16.mxu0 %v258
    %349 = vmatpush1.bf16.msra.mxu0 %v257
    %350 = vmatprep.subr.bf16.mxu0 0
    %351 = vmatpush1.bf16.msra.mxu0 0
    %352 = vmatprep.subr.bf16.mxu0 0
    %353 = vmatpush1.bf16.msra.mxu0 0
    %354 = vmatprep.subr.bf16.mxu0 0
    %355 = vmatpush1.bf16.msra.mxu0 0
    %356 = vmatprep.subr.bf16.mxu0 0
    %357 = vmatpush1.bf16.msra.mxu0 0
    %358 = vmatprep.subr.bf16.mxu0 0
    %359 = vmatpush1.bf16.msra.mxu0 0
    %360 = vmatprep.subr.bf16.mxu0 0
    %361 = vmatpush1.bf16.msra.mxu0 0
    %362 = vmatprep.subr.bf16.mxu0 0
    %363 = vmatpush1.bf16.msra.mxu0 0
    %364 = vmatprep.subr.bf16.mxu0 0
    %365 = vmatpush1.bf16.msra.mxu0 0
    %366 = vmatprep.mubr.bf16.mxu0 0
    %367 = vmatmul.mubr.bf16.gmra.mrb[0].mxu0 %v129
    %v368 = vpop.f32.mrb[0].mxu0
    %v369 = vadd.f32 %v116, %v368
    %v370 = vpop.f32.mrb[0].mxu0
    %v371 = vadd.f32 %v120, %v370
    %v372 = vpop.f32.mrb[0].mxu0
    %v373 = vadd.f32 %v116, %v372
    %v374 = vpop.f32.mrb[0].mxu0
    %v375 = vadd.f32 %v120, %v374
    %376 = vdwg.mxu0
    %v377 = vmul.f32 %v326, 0.5
    %v378 = vmul.f32 %v328, 0.5
    %v379 = vmul.f32 %v369, 0.5
    %v380 = vmul.f32 %v371, 0.5
    %v381 = vmul.f32 %v330, 0.5
    %v382 = vmul.f32 %v332, 0.5
    %v383 = vmul.f32 %v373, 0.5
    %v384 = vmul.f32 %v375, 0.5
    %v385 = vmul.f32 %v326, 0.044715
    %v386 = vmul.f32 %v328, 0.044715
    %v387 = vmul.f32 %v369, 0.044715
    %v388 = vmul.f32 %v371, 0.044715
    %v389 = vmul.f32 %v330, 0.044715
    %v390 = vmul.f32 %v332, 0.044715
    %v391 = vmul.f32 %v373, 0.044715
    %v392 = vmul.f32 %v375, 0.044715
    %v393 = vmul.f32 %v385, %v326
    %v394 = vmul.f32 %v386, %v328
    %v395 = vmul.f32 %v387, %v369
    %v396 = vmul.f32 %v388, %v371
    %v397 = vmul.f32 %v389, %v330
    %v398 = vmul.f32 %v390, %v332
    %v399 = vmul.f32 %v391, %v373
    %v400 = vmul.f32 %v392, %v375
    %v401 = vmul.f32 %v393, %v326
    %v402 = vmul.f32 %v394, %v328
    %v403 = vmul.f32 %v395, %v369
    %v404 = vmul.f32 %v396, %v371
    %v405 = vmul.f32 %v397, %v330
    %v406 = vmul.f32 %v398, %v332
    %v407 = vmul.f32 %v399, %v373
    %v408 = vmul.f32 %v400, %v375
    %v409 = vadd.f32 %v326, %v401
    %v410 = vadd.f32 %v328, %v402
    %v411 = vadd.f32 %v369, %v403
    %v412 = vadd.f32 %v371, %v404
    %v413 = vadd.f32 %v330, %v405
    %v414 = vadd.f32 %v332, %v406
    %v415 = vadd.f32 %v373, %v407
    %v416 = vadd.f32 %v375, %v408
    %v417 = vmul.f32 %v409, 0.7978846
    %v418 = vmul.f32 %v410, 0.7978846
    %v419 = vmul.f32 %v411, 0.7978846
    %v420 = vmul.f32 %v412, 0.7978846
    %v421 = vmul.f32 %v413, 0.7978846
    %v422 = vmul.f32 %v414, 0.7978846
    %v423 = vmul.f32 %v415, 0.7978846
    %v424 = vmul.f32 %v416, 0.7978846
    %v425 = vtanh.pop %v417
    %v426 = vtanh.pop %v418
    %v427 = vtanh.pop %v419
    %v428 = vtanh.pop %v420
    %v429 = vtanh.pop %v421
    %v430 = vtanh.pop %v422
    %v431 = vtanh.pop %v423
    %v432 = vtanh.pop %v424
    %v433 = vadd.f32 %v425, 1.0
    %v434 = vadd.f32 %v426, 1.0
    %v435 = vadd.f32 %v427, 1.0
    %v436 = vadd.f32 %v428, 1.0
    %v437 = vadd.f32 %v429, 1.0
    %v438 = vadd.f32 %v430, 1.0
    %v439 = vadd.f32 %v431, 1.0
    %v440 = vadd.f32 %v432, 1.0
    %v441 = vmul.f32 %v377, %v433
    %v442 = vmul.f32 %v378, %v434
    %v443 = vmul.f32 %v379, %v435
    %v444 = vmul.f32 %v380, %v436
    %v445 = vmul.f32 %v381, %v437
    %v446 = vmul.f32 %v382, %v438
    %v447 = vmul.f32 %v383, %v439
    %v448 = vmul.f32 %v384, %v440
    %v449 = vld [vmem:[#allocation2] sm:$0xff]
    %v450 = vld [vmem:[#allocation2 + $0x8] sm:$0xff]
    %v451 = vpack.c.bf16 %v445, %v441
    %v452 = vpack.c.bf16 %v446, %v442
    %v453 = vpack.c.bf16 %v447, %v443
    %v454 = vpack.c.bf16 %v448, %v444
    %v455 = vld [vmem:[#allocation8] sm:$0xf]
    %v456 = vld [vmem:[#allocation8 + $0x4] sm:$0xf]
    %v457 = vld [vmem:[#allocation8 + $0x8] sm:$0xf]
    %v458 = vld [vmem:[#allocation8 + $0xc] sm:$0xf]
    %v459 = vld [vmem:[#allocation8 + $0x10] sm:$0xf]
    %v460 = vld [vmem:[#allocation8 + $0x14] sm:$0xf]
    %v461 = vld [vmem:[#allocation8 + $0x18] sm:$0xf]
    %v462 = vld [vmem:[#allocation8 + $0x1c] sm:$0xf]
    %v463 = vld [vmem:[#allocation8 + $0x20] sm:$0xf]
    %v464 = vld [vmem:[#allocation8 + $0x24] sm:$0xf]
    %v465 = vld [vmem:[#allocation8 + $0x28] sm:$0xf]
    %v466 = vld [vmem:[#allocation8 + $0x2c] sm:$0xf]
    %v467 = vld [vmem:[#allocation8 + $0x30] sm:$0xf]
    %v468 = vld [vmem:[#allocation8 + $0x34] sm:$0xf]
    %v469 = vld [vmem:[#allocation8 + $0x38] sm:$0xf]
    %v470 = vld [vmem:[#allocation8 + $0x3c] sm:$0xf]
    %v471 = vld [vmem:[#allocation8 + $0x40] sm:$0xf]
    %v472 = vld [vmem:[#allocation8 + $0x44] sm:$0xf]
    %v473 = vld [vmem:[#allocation8 + $0x48] sm:$0xf]
    %v474 = vld [vmem:[#allocation8 + $0x4c] sm:$0xf]
    %v475 = vld [vmem:[#allocation8 + $0x50] sm:$0xf]
    %v476 = vld [vmem:[#allocation8 + $0x54] sm:$0xf]
    %v477 = vld [vmem:[#allocation8 + $0x58] sm:$0xf]
    %v478 = vld [vmem:[#allocation8 + $0x5c] sm:$0xf]
    %v479 = vld [vmem:[#allocation8 + $0x60] sm:$0xf]
    %v480 = vld [vmem:[#allocation8 + $0x64] sm:$0xf]
    %v481 = vld [vmem:[#allocation8 + $0x68] sm:$0xf]
    %v482 = vld [vmem:[#allocation8 + $0x6c] sm:$0xf]
    %v483 = vld [vmem:[#allocation8 + $0x70] sm:$0xf]
    %v484 = vld [vmem:[#allocation8 + $0x74] sm:$0xf]
    %v485 = vld [vmem:[#allocation8 + $0x78] sm:$0xf]
    %v486 = vld [vmem:[#allocation8 + $0x7c] sm:$0xf]
    %v487 = vld [vmem:[#allocation8 + $0x80] sm:$0xf]
    %v488 = vld [vmem:[#allocation8 + $0x84] sm:$0xf]
    %v489 = vld [vmem:[#allocation8 + $0x88] sm:$0xf]
    %v490 = vld [vmem:[#allocation8 + $0x8c] sm:$0xf]
    %v491 = vld [vmem:[#allocation8 + $0x90] sm:$0xf]
    %v492 = vld [vmem:[#allocation8 + $0x94] sm:$0xf]
    %v493 = vld [vmem:[#allocation8 + $0x98] sm:$0xf]
    %v494 = vld [vmem:[#allocation8 + $0x9c] sm:$0xf]
    %v495 = vld [vmem:[#allocation8 + $0xa0] sm:$0xf]
    %v496 = vld [vmem:[#allocation8 + $0xa4] sm:$0xf]
    %v497 = vld [vmem:[#allocation8 + $0xa8] sm:$0xf]
    %v498 = vld [vmem:[#allocation8 + $0xac] sm:$0xf]
    %v499 = vld [vmem:[#allocation8 + $0xb0] sm:$0xf]
    %v500 = vld [vmem:[#allocation8 + $0xb4] sm:$0xf]
    %v501 = vld [vmem:[#allocation8 + $0xb8] sm:$0xf]
    %v502 = vld [vmem:[#allocation8 + $0xbc] sm:$0xf]
    %v503 = vld [vmem:[#allocation8 + $0xc0] sm:$0xf]
    %v504 = vld [vmem:[#allocation8 + $0xc4] sm:$0xf]
    %v505 = vld [vmem:[#allocation8 + $0xc8] sm:$0xf]
    %v506 = vld [vmem:[#allocation8 + $0xcc] sm:$0xf]
    %v507 = vld [vmem:[#allocation8 + $0xd0] sm:$0xf]
    %v508 = vld [vmem:[#allocation8 + $0xd4] sm:$0xf]
    %v509 = vld [vmem:[#allocation8 + $0xd8] sm:$0xf]
    %v510 = vld [vmem:[#allocation8 + $0xdc] sm:$0xf]
    %v511 = vld [vmem:[#allocation8 + $0xe0] sm:$0xf]
    %v512 = vld [vmem:[#allocation8 + $0xe4] sm:$0xf]
    %v513 = vld [vmem:[#allocation8 + $0xe8] sm:$0xf]
    %v514 = vld [vmem:[#allocation8 + $0xec] sm:$0xf]
    %v515 = vld [vmem:[#allocation8 + $0xf0] sm:$0xf]
    %v516 = vld [vmem:[#allocation8 + $0xf4] sm:$0xf]
    %v517 = vld [vmem:[#allocation8 + $0xf8] sm:$0xf]
    %v518 = vld [vmem:[#allocation8 + $0xfc] sm:$0xf]
    %v583 = vunpack.c.l.b16 %v455
    %v584 = vunpack.c.l.b16 %v456
    %v585 = vunpack.c.l.b16 %v457
    %v586 = vunpack.c.l.b16 %v458
    %v587 = vunpack.c.l.b16 %v459
    %v588 = vunpack.c.l.b16 %v460
    %v589 = vunpack.c.l.b16 %v461
    %v590 = vunpack.c.l.b16 %v462
    %v591 = vunpack.c.l.b16 %v463
    %v592 = vunpack.c.l.b16 %v464
    %v593 = vunpack.c.l.b16 %v465
    %v594 = vunpack.c.l.b16 %v466
    %v595 = vunpack.c.l.b16 %v467
    %v596 = vunpack.c.l.b16 %v468
    %v597 = vunpack.c.l.b16 %v469
    %v598 = vunpack.c.l.b16 %v470
    %v599 = vunpack.c.l.b16 %v471
    %v600 = vunpack.c.l.b16 %v472
    %v601 = vunpack.c.l.b16 %v473
    %v602 = vunpack.c.l.b16 %v474
    %v603 = vunpack.c.l.b16 %v475
    %v604 = vunpack.c.l.b16 %v476
    %v605 = vunpack.c.l.b16 %v477
    %v606 = vunpack.c.l.b16 %v478
    %v607 = vunpack.c.l.b16 %v479
    %v608 = vunpack.c.l.b16 %v480
    %v609 = vunpack.c.l.b16 %v481
    %v610 = vunpack.c.l.b16 %v482
    %v611 = vunpack.c.l.b16 %v483
    %v612 = vunpack.c.l.b16 %v484
    %v613 = vunpack.c.l.b16 %v485
    %v614 = vunpack.c.l.b16 %v486
    %v615 = vunpack.c.l.b16 %v487
    %v616 = vunpack.c.l.b16 %v488
    %v617 = vunpack.c.l.b16 %v489
    %v618 = vunpack.c.l.b16 %v490
    %v619 = vunpack.c.l.b16 %v491
    %v620 = vunpack.c.l.b16 %v492
    %v621 = vunpack.c.l.b16 %v493
    %v622 = vunpack.c.l.b16 %v494
    %v623 = vunpack.c.l.b16 %v495
    %v624 = vunpack.c.l.b16 %v496
    %v625 = vunpack.c.l.b16 %v497
    %v626 = vunpack.c.l.b16 %v498
    %v627 = vunpack.c.l.b16 %v499
    %v628 = vunpack.c.l.b16 %v500
    %v629 = vunpack.c.l.b16 %v501
    %v630 = vunpack.c.l.b16 %v502
    %v631 = vunpack.c.l.b16 %v503
    %v632 = vunpack.c.l.b16 %v504
    %v633 = vunpack.c.l.b16 %v505
    %v634 = vunpack.c.l.b16 %v506
    %v635 = vunpack.c.l.b16 %v507
    %v636 = vunpack.c.l.b16 %v508
    %v637 = vunpack.c.l.b16 %v509
    %v638 = vunpack.c.l.b16 %v510
    %v639 = vunpack.c.l.b16 %v511
    %v640 = vunpack.c.l.b16 %v512
    %v641 = vunpack.c.l.b16 %v513
    %v642 = vunpack.c.l.b16 %v514
    %v643 = vunpack.c.l.b16 %v515
    %v644 = vunpack.c.l.b16 %v516
    %v645 = vunpack.c.l.b16 %v517
    %v646 = vunpack.c.l.b16 %v518
    %v647 = vpack.c.b16 %v584, %v583
    %v648 = vpack.c.b16 %v586, %v585
    %v649 = vpack.c.b16 %v588, %v587
    %v650 = vpack.c.b16 %v590, %v589
    %v651 = vpack.c.b16 %v592, %v591
    %v652 = vpack.c.b16 %v594, %v593
    %v653 = vpack.c.b16 %v596, %v595
    %v654 = vpack.c.b16 %v598, %v597
    %v655 = vpack.c.b16 %v600, %v599
    %v656 = vpack.c.b16 %v602, %v601
    %v657 = vpack.c.b16 %v604, %v603
    %v658 = vpack.c.b16 %v606, %v605
    %v659 = vpack.c.b16 %v608, %v607
    %v660 = vpack.c.b16 %v610, %v609
    %v661 = vpack.c.b16 %v612, %v611
    %v662 = vpack.c.b16 %v614, %v613
    %v663 = vpack.c.b16 %v616, %v615
    %v664 = vpack.c.b16 %v618, %v617
    %v665 = vpack.c.b16 %v620, %v619
    %v666 = vpack.c.b16 %v622, %v621
    %v667 = vpack.c.b16 %v624, %v623
    %v668 = vpack.c.b16 %v626, %v625
    %v669 = vpack.c.b16 %v628, %v627
    %v670 = vpack.c.b16 %v630, %v629
    %v671 = vpack.c.b16 %v632, %v631
    %v672 = vpack.c.b16 %v634, %v633
    %v673 = vpack.c.b16 %v636, %v635
    %v674 = vpack.c.b16 %v638, %v637
    %v675 = vpack.c.b16 %v640, %v639
    %v676 = vpack.c.b16 %v642, %v641
    %v677 = vpack.c.b16 %v644, %v643
    %v678 = vpack.c.b16 %v646, %v645
    %711 = vmatprep.subr.bf16.mxu0 0
    %712 = vmatpush1.bf16.msra.mxu0 %v647
    %713 = vmatprep.subr.bf16.mxu0 0
    %714 = vmatpush1.bf16.msra.mxu0 %v648
    %715 = vmatprep.subr.bf16.mxu0 0
    %716 = vmatpush1.bf16.msra.mxu0 %v649
    %717 = vmatprep.subr.bf16.mxu0 0
    %718 = vmatpush1.bf16.msra.mxu0 %v650
    %719 = vmatprep.subr.bf16.mxu0 0
    %720 = vmatpush1.bf16.msra.mxu0 %v651
    %721 = vmatprep.subr.bf16.mxu0 0
    %722 = vmatpush1.bf16.msra.mxu0 %v652
    %723 = vmatprep.subr.bf16.mxu0 0
    %724 = vmatpush1.bf16.msra.mxu0 %v653
    %725 = vmatprep.subr.bf16.mxu0 0
    %726 = vmatpush1.bf16.msra.mxu0 %v654
    %727 = vmatprep.subr.bf16.mxu0 0
    %728 = vmatpush1.bf16.msra.mxu0 %v655
    %729 = vmatprep.subr.bf16.mxu0 0
    %730 = vmatpush1.bf16.msra.mxu0 %v656
    %731 = vmatprep.subr.bf16.mxu0 0
    %732 = vmatpush1.bf16.msra.mxu0 %v657
    %733 = vmatprep.subr.bf16.mxu0 0
    %734 = vmatpush1.bf16.msra.mxu0 %v658
    %735 = vmatprep.subr.bf16.mxu0 0
    %736 = vmatpush1.bf16.msra.mxu0 %v659
    %737 = vmatprep.subr.bf16.mxu0 0
    %738 = vmatpush1.bf16.msra.mxu0 %v660
    %739 = vmatprep.subr.bf16.mxu0 0
    %740 = vmatpush1.bf16.msra.mxu0 %v661
    %741 = vmatprep.subr.bf16.mxu0 0
    %742 = vmatpush1.bf16.msra.mxu0 %v662
    %743 = vmatprep.mubr.bf16.mxu0 %v452
    %744 = vmatmul.mubr.bf16.gmra.mrb[0].mxu0 %v451
    %v745 = vpop.f32.mrb[0].mxu0
    %v746 = vadd.f32 0.0, %v745
    %v747 = vpop.f32.mrb[0].mxu0
    %v748 = vpop.f32.mrb[0].mxu0
    %v749 = vadd.f32 0.0, %v748
    %v750 = vpop.f32.mrb[0].mxu0
    %751 = vdwg.mxu0
    %752 = vmatprep.subr.bf16.mxu0 0
    %753 = vmatpush1.bf16.msra.mxu0 %v663
    %754 = vmatprep.subr.bf16.mxu0 0
    %755 = vmatpush1.bf16.msra.mxu0 %v664
    %756 = vmatprep.subr.bf16.mxu0 0
    %757 = vmatpush1.bf16.msra.mxu0 %v665
    %758 = vmatprep.subr.bf16.mxu0 0
    %759 = vmatpush1.bf16.msra.mxu0 %v666
    %760 = vmatprep.subr.bf16.mxu0 0
    %761 = vmatpush1.bf16.msra.mxu0 %v667
    %762 = vmatprep.subr.bf16.mxu0 0
    %763 = vmatpush1.bf16.msra.mxu0 %v668
    %764 = vmatprep.subr.bf16.mxu0 0
    %765 = vmatpush1.bf16.msra.mxu0 %v669
    %766 = vmatprep.subr.bf16.mxu0 0
    %767 = vmatpush1.bf16.msra.mxu0 %v670
    %768 = vmatprep.subr.bf16.mxu0 0
    %769 = vmatpush1.bf16.msra.mxu0 %v671
    %770 = vmatprep.subr.bf16.mxu0 0
    %771 = vmatpush1.bf16.msra.mxu0 %v672
    %772 = vmatprep.subr.bf16.mxu0 0
    %773 = vmatpush1.bf16.msra.mxu0 %v673
    %774 = vmatprep.subr.bf16.mxu0 0
    %775 = vmatpush1.bf16.msra.mxu0 %v674
    %776 = vmatprep.subr.bf16.mxu0 0
    %777 = vmatpush1.bf16.msra.mxu0 %v675
    %778 = vmatprep.subr.bf16.mxu0 0
    %779 = vmatpush1.bf16.msra.mxu0 %v676
    %780 = vmatprep.subr.bf16.mxu0 0
    %781 = vmatpush1.bf16.msra.mxu0 %v677
    %782 = vmatprep.subr.bf16.mxu0 0
    %783 = vmatpush1.bf16.msra.mxu0 %v678
    %784 = vmatprep.mubr.bf16.mxu0 %v454
    %785 = vmatmul.mubr.bf16.gmra.mrb[0].mxu0 %v453
    %v786 = vpop.f32.mrb[0].mxu0
    %v787 = vadd.f32 %v746, %v786
    %v788 = vpop.f32.mrb[0].mxu0
    %v789 = vpop.f32.mrb[0].mxu0
    %v790 = vadd.f32 %v749, %v789
    %v791 = vpop.f32.mrb[0].mxu0
    %792 = vdwg.mxu0
    %v793 = vadd.f32 %v449, %v787
    %v794 = vadd.f32 %v450, %v790
    %795 = vst [vmem:[#allocation2] sm:$0xff] %v793
    %796 = vst [vmem:[#allocation2 + $0x8] sm:$0xff] %v794
    // Predicated region
    $region38: #{tpu_custom_call.1} parent=1 // pred_check
      %p797 = pneg %p63
    $region39: #{tpu_custom_call.1} parent=1 // pred_check_branch
      %799 = sbr.rel (%p797) target = $region41
    $region40: #{tpu_custom_call.1} parent=1 // pred_region
      %v800 = vld [vmem:[#allocation2] sm:$0xff]
      %v801 = vld [vmem:[#allocation2 + $0x8] sm:$0xff]
      %v802 = vld [vmem:[%s4] sm:$0x1]
      %v804 = vlaneseq
      %v805 = vshrl.u32 %v804, 7
      %v806 = vsub.s32 0, %v805
      %v807 = vrot.slane %v802, %v806
      %v809 = vadd.f32 %v800, %v807
      %v810 = vadd.f32 %v801, %v807
      %811 = vst [vmem:[#allocation9] sm:$0xff] %v809
      %812 = vst [vmem:[#allocation9 + $0x8] sm:$0xff] %v810
    $region41: #{tpu_custom_call.1} parent=1 // pred_fallthru
      _
    // Predicated region
    $region42: #{tpu_custom_call.1} parent=1 // pred_check
      _
    $region43: #{tpu_custom_call.1} parent=1 // pred_check_branch
      %814 = sbr.rel (0) target = $region45
    $region44: #{tpu_custom_call.1} parent=1 // pred_region
      %s816 = ssub.s32 256, 256
      %817 = vsyncadd [#allocation5], %s816
      %s818 = sshll.u32 [#allocation9], 4
      %s819 = int_to_ptr.vmem [resolvable:$true] %s818
      %824 = dma.vmem_to_hbm [thread:$0]  %s819, 256, %s5, [#allocation5], 128, 128, 8
    $region45: #{tpu_custom_call.1} parent=1 // pred_fallthru
      _
    // Predicated region
    $region46: #{tpu_custom_call.1} parent=1 // pred_check
      _
    $region47: #{tpu_custom_call.1} parent=1 // pred_check_branch
      %826 = sbr.rel (0) target = $region49
    $region48: #{tpu_custom_call.1} parent=1 // pred_region
      %827 = dma.done [#allocation5], 256
    $region49: #{tpu_custom_call.1} parent=1 // pred_fallthru
      _
    %828 = vsyncpa [#allocation4], 1
    %829 = vsyncpa [#allocation7], 1
    %830 = vsyncpa [#allocation5], 1

</llo_original>
